<compile_context>
chip_gen: v6e
topology: v6e:2x2x1
jax: 0.10.0
libtpu: 0.0.40
codegen_flags: <defaults>
</compile_context>

<pallas_src>
import jax
import jax.numpy as jnp
from jax.experimental import pallas as pl
from jax.experimental.pallas import tpu as pltpu


def _round_up(n: int, m: int) -> int:
    return ((n + m - 1) // m) * m


def prophecy_kernel(x_ref, out_ref):
    # x_ref / out_ref: (2, TB) — features on sublanes, batch on lanes.
    x = x_ref[...]
    x0 = x[0:1, :]
    x1 = x[1:2, :]

    # Layer 1: relu(x @ W1.T), W1 = [[1,-1],[1,1]]
    h1_0 = jnp.maximum(x0 - x1, 0.0)
    h1_1 = jnp.maximum(x0 + x1, 0.0)

    # Layer 2: relu(h1 @ W2.T), W2 = [[0.5,-0.2],[-0.5,0.1]]
    h2_0 = jnp.maximum(0.5 * h1_0 - 0.2 * h1_1, 0.0)
    h2_1 = jnp.maximum(-0.5 * h1_0 + 0.1 * h1_1, 0.0)

    # Layer 3: h2 @ W3.T, W3 = [[1,-1],[-1,1]]  =>  y1 = -y0
    y0 = h2_0 - h2_1
    out_ref[...] = jnp.concatenate([y0, -y0], axis=0)


def prophecy_paper_network(x, *, tb_max: int = 8192):
    """x: (B, 2) float32 -> (B, 2) float32, matching the PyTorch module."""
    B, F = x.shape
    assert F == 2, "ProphecyPaperNetwork expects 2 input features"
    x = x.astype(jnp.float32)

    # Lane-dense layout: batch on the (fast) lane axis.
    x_t = x.T  # (2, B)

    # Batch tile: multiple of 128 lanes, capped so in+out double buffers stay
    # tiny (well under v7x's 64 MiB VMEM / 32 MiB scoped default).
    tb = min(tb_max, _round_up(B, 128))
    b_pad = _round_up(B, tb)
    if b_pad != B:
        x_t = jnp.pad(x_t, ((0, 0), (0, b_pad - B)))

    grid = (b_pad // tb,)

    out_t = pl.pallas_call(
        prophecy_kernel,
        out_shape=jax.ShapeDtypeStruct((2, b_pad), jnp.float32),
        grid=grid,
        in_specs=[pl.BlockSpec((2, tb), lambda i: (0, i))],
        out_specs=pl.BlockSpec((2, tb), lambda i: (0, i)),
        compiler_params=pltpu.CompilerParams(
            dimension_semantics=("parallel",)),
    )(x_t)

    return out_t[:, :B].T  # back to (B, 2)


def _reference(x):
    w1 = jnp.array([[1.0, -1.0], [1.0, 1.0]], dtype=jnp.float32)
    w2 = jnp.array([[0.5, -0.2], [-0.5, 0.1]], dtype=jnp.float32)
    w3 = jnp.array([[1.0, -1.0], [-1.0, 1.0]], dtype=jnp.float32)
    h1 = jnp.maximum(x @ w1.T, 0.0)
    h2 = jnp.maximum(h1 @ w2.T, 0.0)
    return h2 @ w3.T


if __name__ == "__main__":
    key = jax.random.PRNGKey(0)

    # Small demo batch, consistent with the module (in_features = 2).
    x = jax.random.normal(key, (8, 2), dtype=jnp.float32)
    y = prophecy_paper_network(x)
    jax.block_until_ready(y)
    y_ref = _reference(x)
    assert y.shape == (8, 2)
    assert jnp.allclose(y, y_ref, atol=1e-5, rtol=1e-5), (y, y_ref)

    # Also exercise a non-multiple-of-128, multi-tile batch to check padding
    # and the gridded path.
    x2 = jax.random.normal(jax.random.PRNGKey(1), (300, 2), dtype=jnp.float32)
    y2 = prophecy_paper_network(x2, tb_max=128)
    jax.block_until_ready(y2)
    assert y2.shape == (300, 2)
    assert jnp.allclose(y2, _reference(x2), atol=1e-5, rtol=1e-5)

    print("KERNEL_OK")
</pallas_src>

<mosaic_0001>
module attributes {stable_mosaic.version = 11 : i64} {
  func.func @prophecy_kernel(%arg0: i32, %arg1: memref<2x128xf32, #tpu.memory_space<vmem>>, %arg2: memref<2x128xf32, #tpu.memory_space<vmem>>) attributes {dimension_semantics = [#tpu.dimension_semantics<parallel>], iteration_bounds = array<i64: 1>, scalar_prefetch = 0 : i64, scratch_operands = 0 : i64, tpu.core_type = #tpu.core_type<tc>, window_params = [{transform_indices = @transform_0, window_bounds = array<i64: 2, 128>}, {transform_indices = @transform_1, window_bounds = array<i64: 2, 128>}]} {
    %c0 = arith.constant 0 : index
    %c0_0 = arith.constant 0 : index
    %0 = vector.load %arg1[%c0, %c0_0] : memref<2x128xf32, #tpu.memory_space<vmem>>, vector<2x128xf32>
    %1 = vector.extract_strided_slice %0 {offsets = [0, 0], sizes = [1, 128], strides = [1, 1]} : vector<2x128xf32> to vector<1x128xf32>
    %2 = vector.extract_strided_slice %0 {offsets = [1, 0], sizes = [1, 128], strides = [1, 1]} : vector<2x128xf32> to vector<1x128xf32>
    %3 = arith.subf %1, %2 : vector<1x128xf32>
    %cst = arith.constant 0.000000e+00 : f32
    %4 = vector.broadcast %cst : f32 to vector<1x128xf32>
    %5 = arith.maximumf %3, %4 : vector<1x128xf32>
    %6 = arith.addf %1, %2 : vector<1x128xf32>
    %cst_1 = arith.constant 0.000000e+00 : f32
    %7 = vector.broadcast %cst_1 : f32 to vector<1x128xf32>
    %8 = arith.maximumf %6, %7 : vector<1x128xf32>
    %cst_2 = arith.constant 5.000000e-01 : f32
    %9 = vector.broadcast %cst_2 : f32 to vector<1x128xf32>
    %10 = arith.mulf %9, %5 : vector<1x128xf32>
    %cst_3 = arith.constant 2.000000e-01 : f32
    %11 = vector.broadcast %cst_3 : f32 to vector<1x128xf32>
    %12 = arith.mulf %11, %8 : vector<1x128xf32>
    %13 = arith.subf %10, %12 : vector<1x128xf32>
    %cst_4 = arith.constant 0.000000e+00 : f32
    %14 = vector.broadcast %cst_4 : f32 to vector<1x128xf32>
    %15 = arith.maximumf %13, %14 : vector<1x128xf32>
    %cst_5 = arith.constant -5.000000e-01 : f32
    %16 = vector.broadcast %cst_5 : f32 to vector<1x128xf32>
    %17 = arith.mulf %16, %5 : vector<1x128xf32>
    %cst_6 = arith.constant 1.000000e-01 : f32
    %18 = vector.broadcast %cst_6 : f32 to vector<1x128xf32>
    %19 = arith.mulf %18, %8 : vector<1x128xf32>
    %20 = arith.addf %17, %19 : vector<1x128xf32>
    %cst_7 = arith.constant 0.000000e+00 : f32
    %21 = vector.broadcast %cst_7 : f32 to vector<1x128xf32>
    %22 = arith.maximumf %20, %21 : vector<1x128xf32>
    %23 = arith.subf %15, %22 : vector<1x128xf32>
    %cst_8 = arith.constant 0.000000e+00 : f32
    %24 = vector.broadcast %cst_8 : f32 to vector<1x128xf32>
    %25 = arith.subf %24, %23 : vector<1x128xf32>
    %26 = tpu.concatenate %23, %25 in 0 : vector<1x128xf32>, vector<1x128xf32> -> vector<2x128xf32>
    %c0_9 = arith.constant 0 : index
    %c0_10 = arith.constant 0 : index
    %27 = vector.load %arg2[%c0_9, %c0_10] : memref<2x128xf32, #tpu.memory_space<vmem>>, vector<2x128xf32>
    tpu.vector_store %arg2[%c0_9, %c0_10], %26 {strides = array<i32>} : memref<2x128xf32, #tpu.memory_space<vmem>>, vector<2x128xf32>,
    return
  }
  func.func @transform_0(%arg0: i32) -> (i32, i32) {
    %c0_i32 = arith.constant 0 : i32
    %c0_i32_0 = arith.constant 0 : i32
    return %c0_i32, %arg0 : i32, i32
  }
  func.func @transform_1(%arg0: i32) -> (i32, i32) {
    %c0_i32 = arith.constant 0 : i32
    %c0_i32_0 = arith.constant 0 : i32
    return %c0_i32, %arg0 : i32, i32
  }
}

</mosaic_0001>

<llo_original>
// kernel: tpu_custom_call.1
$region0: #{tpu_custom_call.1}
  #allocation0 [shape = 'u32[]', space=smem, size = 0x4, offset = 0x4, fixed_abs, tag = 'smem constant byte address 0x4 - core index']
  #allocation1 [shape = 'u32[144,128]{1,0:T(1,128)}', space=vmem, size = 0x12000, scoped, tag = 'internal scratch']
  %s0 = inlined_call_operand.hbm [shape: f32[2,128], index: 0, kind: input, shape index: {}]
  %s1 = inlined_call_operand.hbm [shape: f32[2,128], index: 1, kind: output, shape index: {}]
  %s2 = sld [smem:[#allocation0]]
  $region18: #{tpu_custom_call.1} parent=0
    _
  %s4 = ssub.s32 1, %s2
  %s5 = scalar_select 0, %s4, %s2
  $region1: #{tpu_custom_call.1} parent=0
    #allocation2 [shape = 'u8[1024]{0}', space=vmem, size = 0x400, scoped, tag = 'input window, operand 0, single buffered']
    #allocation3 [shape = 's32[1]{0}', space=sflag, size = 0x4, scoped, tag = 'scoped memory for tpu_custom_call.1']
    #allocation4 [shape = 's32[1]{0}', space=sflag, size = 0x4, scoped, tag = 'scoped memory for tpu_custom_call.1']
    #allocation5 [shape = 'u8[1024]{0}', space=vmem, size = 0x400, scoped, tag = 'output window, operand 0, single buffered']
    %6 = vsyncpa [#allocation3], 0
    %7 = vsyncpa [#allocation4], 0
    // Predicated region
    $region2: #{tpu_custom_call.1} parent=1 // pred_check
      _
    $region3: #{tpu_custom_call.1} parent=1 // pred_check_branch
      %9 = sbr.rel (0) target = $region5
    $region4: #{tpu_custom_call.1} parent=1 // pred_region
      %s11 = ssub.s32 32, 32
      %12 = vsyncadd [#allocation3], %s11
      %s14 = sshll.u32 [#allocation2], 4
      %s15 = int_to_ptr.vmem [resolvable:$true] %s14
      %17 = dma.hbm_to_vmem [thread:$0]  %s0, 32, %s15, [#allocation3]
    $region5: #{tpu_custom_call.1} parent=1 // pred_fallthru
      _
    // Predicated region
    $region6: #{tpu_custom_call.1} parent=1 // pred_check
      _
    $region7: #{tpu_custom_call.1} parent=1 // pred_check_branch
      %19 = sbr.rel (0) target = $region9
    $region8: #{tpu_custom_call.1} parent=1 // pred_region
      %20 = dma.done [#allocation3], 32
    $region9: #{tpu_custom_call.1} parent=1 // pred_fallthru
      _
    %v21 = vld [vmem:[#allocation2] sm:$0x3]
    %v23 = vrot.slane %v21, 1
    %v25 = vsub.f32 %v21, %v23
    %v26 = vmax.f32 %v25, 0.0
    %v27 = vadd.f32 %v21, %v23
    %v28 = vmax.f32 %v27, 0.0
    %v29 = vmul.f32 %v26, 0.5
    %v30 = vmul.f32 %v28, 0.2
    %v31 = vsub.f32 %v29, %v30
    %v32 = vmax.f32 %v31, 0.0
    %v33 = vmul.f32 %v26, -0.5
    %v34 = vmul.f32 %v28, 0.1
    %v35 = vadd.f32 %v33, %v34
    %v36 = vmax.f32 %v35, 0.0
    %v37 = vsub.f32 %v32, %v36
    %v38 = vsub.f32 0.0, %v37
    %v40 = vrot.slane %v38, 7
    %vm42 = vcmask 1040384
    %v43 = vsel %vm42, %v37, %v40
    %44 = vst [vmem:[#allocation5] sm:$0x3] %v43
    // Predicated region
    $region10: #{tpu_custom_call.1} parent=1 // pred_check
      _
    $region11: #{tpu_custom_call.1} parent=1 // pred_check_branch
      %46 = sbr.rel (0) target = $region13
    $region12: #{tpu_custom_call.1} parent=1 // pred_region
      %s48 = ssub.s32 32, 32
      %49 = vsyncadd [#allocation4], %s48
      %s51 = sshll.u32 [#allocation5], 4
      %s52 = int_to_ptr.vmem [resolvable:$true] %s51
      %54 = dma.vmem_to_hbm [thread:$0]  %s52, 32, %s1, [#allocation4]
    $region13: #{tpu_custom_call.1} parent=1 // pred_fallthru
      _
    // Predicated region
    $region14: #{tpu_custom_call.1} parent=1 // pred_check
      _
    $region15: #{tpu_custom_call.1} parent=1 // pred_check_branch
      %56 = sbr.rel (0) target = $region17
    $region16: #{tpu_custom_call.1} parent=1 // pred_region
      %57 = dma.done [#allocation4], 32
    $region17: #{tpu_custom_call.1} parent=1 // pred_fallthru
      _
    %58 = vsyncpa [#allocation3], 1
    %59 = vsyncpa [#allocation4], 1

</llo_original>
